<compile_context>
chip_gen: v5e
topology: v5e:2x2
jax: 0.10.0
libtpu: 0.0.40
codegen_flags: <defaults>
</compile_context>

<pallas_src>
import math

import jax
import jax.numpy as jnp
from jax import lax
from jax.experimental import pallas as pl
from jax.experimental.pallas import tpu as pltpu

EPS = 1e-5      # torch.nn.GroupNorm default eps
_LANE = 128


# ---------------------------------------------------------------------------
# Fused path: whole (1, Cp, HWk) sample resident in VMEM.
#   mean -> centered variance -> normalize+affine, single read / single write.
# ---------------------------------------------------------------------------
def _gn_fused_kernel(x_ref, g_ref, b_ref, o_ref):
    x = x_ref[...].astype(jnp.float32)            # (1, Cp, HWk)
    count = x.shape[1] * x.shape[2]
    mean = jnp.sum(x) / count
    xc = x - mean
    var = jnp.sum(xc * xc) / count                # centered: no cancellation
    inv = lax.rsqrt(var + EPS)
    o_ref[...] = (xc * (inv * g_ref[...]) + b_ref[...]).astype(o_ref.dtype)


# ---------------------------------------------------------------------------
# Fallback phase 1: per-(batch, split) sum / sum-of-squares over lane tiles.
# Vreg-shaped accumulators; the expensive cross-lane reduce happens once.
# ---------------------------------------------------------------------------
def _gn_stats_kernel(x_ref, s1_ref, s2_ref, acc1_ref, acc2_ref):
    t = pl.program_id(2)

    @pl.when(t == 0)
    def _init():
        acc1_ref[...] = jnp.zeros_like(acc1_ref)
        acc2_ref[...] = jnp.zeros_like(acc2_ref)

    x = x_ref[...].astype(jnp.float32)            # (1, Cp, LT)
    lt = x.shape[2]
    p1 = jnp.zeros(acc1_ref.shape, jnp.float32)   # (1, Cp, 128)
    p2 = jnp.zeros(acc2_ref.shape, jnp.float32)
    n_full = lt // _LANE
    for j in range(n_full):                       # pure VPU adds per step
        c = x[:, :, j * _LANE:(j + 1) * _LANE]
        p1 = p1 + c
        p2 = p2 + c * c
    if lt % _LANE != 0:                           # ragged tail (rare): lane-reduce it
        tail = x[:, :, n_full * _LANE:]
        p1 = p1.at[:, :, 0:1].add(jnp.sum(tail, axis=2, keepdims=True))
        p2 = p2.at[:, :, 0:1].add(jnp.sum(tail * tail, axis=2, keepdims=True))
    acc1_ref[...] += p1
    acc2_ref[...] += p2

    @pl.when(t == pl.num_programs(2) - 1)
    def _finalize():
        s1_ref[...] = jnp.sum(acc1_ref[...]).reshape(1, 1, 1, 1)
        s2_ref[...] = jnp.sum(acc2_ref[...]).reshape(1, 1, 1, 1)


# ---------------------------------------------------------------------------
# Fallback phase 2: out = x * a + b   (a, b pre-fold mean / rstd / gamma / beta)
# ---------------------------------------------------------------------------
def _gn_apply_kernel(x_ref, a_ref, b_ref, o_ref):
    o_ref[...] = (x_ref[...] * a_ref[...] + b_ref[...]).astype(o_ref.dtype)


# ---------------------------------------------------------------------------
# Helpers
# ---------------------------------------------------------------------------
def _vmem_capacity_bytes():
    try:
        return int(pltpu.get_tpu_info().vmem_capacity_bytes)
    except Exception:
        return 64 * 1024 * 1024   # conservative (v7x per-TC)


def _pick_pack_factor(C, HW, sub, max_cp=256):
    """Fold a spatial factor k into channels so Cp=C*k matches the packed-sublane
    tiling (8 f32 / 16 bf16 / 32 int8), then grow k while lanes stay 128-dense so
    tiles are tall (bigger per-step working set)."""
    k = sub // math.gcd(C, sub)
    if HW % k != 0:
        return 1
    while (C * k * 2 <= max_cp and HW % (k * 2) == 0
           and (HW // (k * 2)) % _LANE == 0):
        k *= 2
    return k


def _pick_lane_tile(hwk, cp, budget=2 * 1024 * 1024):
    """Largest multiple-of-128 divisor of hwk with a ~2 MiB f32 tile."""
    if hwk % _LANE != 0:
        # TODO(synk): HWk with no multiple-of-128 divisor — single full-width block
        # (masked stores); padding + masked stats not implemented.
        return hwk
    m = hwk // _LANE
    dmax = max(1, min(m, budget // (cp * _LANE * 4)))
    for d in range(dmax, 0, -1):
        if m % d == 0:
            return d * _LANE
    return _LANE


# ---------------------------------------------------------------------------
# GroupNorm(1, C) on NCHW input
# ---------------------------------------------------------------------------
def groupnorm1(x_nchw, gamma, beta, *, force_two_pass=False):
    N, C, H, W = x_nchw.shape
    HW = H * W
    itemsize = int(x_nchw.dtype.itemsize)
    sub = max(8, 32 // max(itemsize, 1))          # packed-sublane multiple per dtype

    k = _pick_pack_factor(C, HW, sub)
    Cp, HWk = C * k, HW // k

    x3 = x_nchw.reshape(N, Cp, HWk)
    gamma_p = jnp.repeat(gamma.astype(jnp.float32), k).reshape(1, Cp, 1)
    beta_p = jnp.repeat(beta.astype(jnp.float32), k).reshape(1, Cp, 1)

    numel = N * Cp * HWk
    slab_f32 = Cp * HWk * 4
    slab_in = Cp * HWk * itemsize

    phys_vmem = _vmem_capacity_bytes()
    big_vmem = phys_vmem >= 100 * 1024 * 1024               # v5e/v6e (128 MiB) vs v7x (64 MiB)
    fused_cap = (8 if big_vmem else 4) * 1024 * 1024        # max per-sample f32 slab for fusion
    vmem_cap = (96 if big_vmem else 40) * 1024 * 1024

    # ---------------- fused single-pass path ----------------
    if slab_f32 <= fused_cap and not force_two_pass:
        vmem_limit = int(min(vmem_cap,
                             max(16 * 1024 * 1024,
                                 4 * slab_in + 3 * slab_f32 + 4 * 1024 * 1024)))
        out = pl.pallas_call(
            _gn_fused_kernel,
            out_shape=jax.ShapeDtypeStruct((N, Cp, HWk), x_nchw.dtype),
            grid=(N,),
            in_specs=[
                pl.BlockSpec((1, Cp, HWk), lambda n: (n, 0, 0)),
                pl.BlockSpec((1, Cp, 1), lambda n: (0, 0, 0)),
                pl.BlockSpec((1, Cp, 1), lambda n: (0, 0, 0)),
            ],
            out_specs=pl.BlockSpec((1, Cp, HWk), lambda n: (n, 0, 0)),
            compiler_params=pltpu.CompilerParams(
                dimension_semantics=("parallel",),
                vmem_limit_bytes=vmem_limit),
            cost_estimate=pl.CostEstimate(
                flops=6 * numel, transcendentals=N,
                bytes_accessed=2 * numel * itemsize),
        )(x3, gamma_p, beta_p)
        return out.reshape(N, C, H, W)

    # ---------------- two-pass fallback (huge slabs) ----------------
    LT = _pick_lane_tile(HWk, Cp)
    T = HWk // LT
    P = 2 if (T % 2 == 0 and T >= 2) else 1       # split reduction: feeds both v7x TCs
    TP = T // P

    tile_f32 = Cp * LT * 4
    tile_in = Cp * LT * itemsize
    vmem_limit = int(min(vmem_cap,
                         max(16 * 1024 * 1024,
                             4 * tile_in + 4 * tile_f32 + 4 * 1024 * 1024)))

    s1, s2 = pl.pallas_call(
        _gn_stats_kernel,
        out_shape=(
            jax.ShapeDtypeStruct((N, P, 1, 1), jnp.float32),
            jax.ShapeDtypeStruct((N, P, 1, 1), jnp.float32),
        ),
        grid=(N, P, TP),
        in_specs=[pl.BlockSpec((1, Cp, LT), lambda n, p, t: (n, 0, p * TP + t))],
        out_specs=(
            pl.BlockSpec((1, 1, 1, 1), lambda n, p, t: (n, p, 0, 0)),
            pl.BlockSpec((1, 1, 1, 1), lambda n, p, t: (n, p, 0, 0)),
        ),
        scratch_shapes=[
            pltpu.VMEM((1, Cp, _LANE), jnp.float32),
            pltpu.VMEM((1, Cp, _LANE), jnp.float32),
        ],
        compiler_params=pltpu.CompilerParams(
            dimension_semantics=("parallel", "parallel", "arbitrary"),
            vmem_limit_bytes=vmem_limit),
        cost_estimate=pl.CostEstimate(
            flops=3 * numel, transcendentals=0,
            bytes_accessed=numel * itemsize),
    )(x3)

    # Fold mean / rstd / gamma / beta into per-(batch, channel) scale+shift.
    # TODO(synk): E[x^2]-E[x]^2 in f32 can cancel for large DC offsets; the fused
    # path uses centered variance, Welford partials for this path not implemented.
    count = float(C * HW)
    s1_t = jnp.sum(s1, axis=(1, 2, 3))            # (N,)
    s2_t = jnp.sum(s2, axis=(1, 2, 3))
    mean = s1_t / count
    var = s2_t / count - mean * mean
    inv = lax.rsqrt(var + EPS)
    a = gamma_p[0, :, 0][None, :] * inv[:, None]  # (N, Cp)
    b = beta_p[0, :, 0][None, :] - mean[:, None] * a
    a3 = a.reshape(N, Cp, 1)
    b3 = b.reshape(N, Cp, 1)

    out = pl.pallas_call(
        _gn_apply_kernel,
        out_shape=jax.ShapeDtypeStruct((N, Cp, HWk), x_nchw.dtype),
        grid=(N, T),
        in_specs=[
            pl.BlockSpec((1, Cp, LT), lambda n, t: (n, 0, t)),
            pl.BlockSpec((1, Cp, 1), lambda n, t: (n, 0, 0)),
            pl.BlockSpec((1, Cp, 1), lambda n, t: (n, 0, 0)),
        ],
        out_specs=pl.BlockSpec((1, Cp, LT), lambda n, t: (n, 0, t)),
        compiler_params=pltpu.CompilerParams(
            dimension_semantics=("parallel", "parallel"),
            vmem_limit_bytes=vmem_limit),
        cost_estimate=pl.CostEstimate(
            flops=2 * numel, transcendentals=0,
            bytes_accessed=2 * numel * itemsize),
    )(x3, a3, b3)

    return out.reshape(N, C, H, W)


def pre_norm(x, gamma, beta, fn):
    """PreNorm.forward: x = GroupNorm(1, dim)(x); return fn(x)."""
    return fn(groupnorm1(x, gamma, beta))


# ---------------------------------------------------------------------------
# Reference + demo
# ---------------------------------------------------------------------------
def _ref_groupnorm1(x, gamma, beta):
    N, C, H, W = x.shape
    xf = x.reshape(N, -1).astype(jnp.float32)
    mean = xf.mean(axis=1, keepdims=True)
    var = ((xf - mean) ** 2).mean(axis=1, keepdims=True)
    xn = ((xf - mean) / jnp.sqrt(var + EPS)).reshape(N, C, H, W)
    return (xn * gamma[None, :, None, None].astype(jnp.float32)
            + beta[None, :, None, None].astype(jnp.float32)).astype(x.dtype)


if __name__ == "__main__":
    key = jax.random.PRNGKey(0)
    kx, kg, kb, kx2, kg2, kb2 = jax.random.split(key, 6)

    # --- small demo consistent with PreNorm(dim=4): fused single-pass path ---
    N, C, H, W = 2, 4, 16, 16
    x = jax.random.normal(kx, (N, C, H, W), dtype=jnp.float32)
    gamma = 1.0 + 0.1 * jax.random.normal(kg, (C,), dtype=jnp.float32)
    beta = 0.1 * jax.random.normal(kb, (C,), dtype=jnp.float32)

    # TODO(synk): `fn` is a constructor argument (LinearAttention in the UNet) with
    # no fixed definition here; it is applied as a plain JAX callable (identity).
    fn = lambda t: t

    out = jax.block_until_ready(pre_norm(x, gamma, beta, fn))
    ref = _ref_groupnorm1(x, gamma, beta)
    assert out.shape == (N, C, H, W)
    assert jnp.allclose(out, ref, atol=1e-4, rtol=1e-4), "mismatch vs reference (fused f32)"

    # --- bf16 input exercises the 16-sublane packing / gamma-repeat mapping ---
    xb = x.astype(jnp.bfloat16)
    outb = jax.block_until_ready(groupnorm1(xb, gamma, beta))
    refb = _ref_groupnorm1(xb, gamma, beta)
    assert jnp.allclose(outb.astype(jnp.float32), refb.astype(jnp.float32),
                        atol=6e-2, rtol=6e-2), "mismatch vs reference (fused bf16)"

    # --- force the large-slab two-pass fallback once for coverage ---
    N2, C2, H2, W2 = 1, 16, 256, 256
    x2 = jax.random.normal(kx2, (N2, C2, H2, W2), dtype=jnp.float32)
    g2 = 1.0 + 0.1 * jax.random.normal(kg2, (C2,), dtype=jnp.float32)
    b2 = 0.1 * jax.random.normal(kb2, (C2,), dtype=jnp.float32)
    out2 = jax.block_until_ready(groupnorm1(x2, g2, b2, force_two_pass=True))
    ref2 = _ref_groupnorm1(x2, g2, b2)
    assert jnp.allclose(out2, ref2, atol=1e-3, rtol=1e-3), "mismatch vs reference (two-pass)"

    print("KERNEL_OK")
</pallas_src>

<mosaic_0001>
module attributes {stable_mosaic.version = 11 : i64} {
  func.func @_gn_fused_kernel(%arg0: i32, %arg1: memref<1x8x128xf32, #tpu.memory_space<vmem>>, %arg2: memref<1x8x1xf32, #tpu.memory_space<vmem>>, %arg3: memref<1x8x1xf32, #tpu.memory_space<vmem>>, %arg4: memref<1x8x128xf32, #tpu.memory_space<vmem>>) attributes {dimension_semantics = [#tpu.dimension_semantics<parallel>], iteration_bounds = array<i64: 2>, scalar_prefetch = 0 : i64, scratch_operands = 0 : i64, tpu.core_type = #tpu.core_type<tc>, window_params = [{transform_indices = @transform_0, window_bounds = array<i64: 1, 8, 128>}, {pipeline_mode = #tpu.pipeline_mode<synchronous>, transform_indices = @transform_1, window_bounds = array<i64: 1, 8, 1>}, {pipeline_mode = #tpu.pipeline_mode<synchronous>, transform_indices = @transform_2, window_bounds = array<i64: 1, 8, 1>}, {transform_indices = @transform_3, window_bounds = array<i64: 1, 8, 128>}]} {
    %c0 = arith.constant 0 : index
    %c0_0 = arith.constant 0 : index
    %c0_1 = arith.constant 0 : index
    %0 = vector.load %arg1[%c0, %c0_0, %c0_1] : memref<1x8x128xf32, #tpu.memory_space<vmem>>, vector<1x8x128xf32>
    %1 = vector.shape_cast %0 : vector<1x8x128xf32> to vector<1x1x8x128xf32>
    %cst = arith.constant dense<0.000000e+00> : vector<1xf32>
    %2 = vector.multi_reduction <add>, %1, %cst [1, 2, 3] : vector<1x1x8x128xf32> to vector<1xf32>
    %3 = vector.shape_cast %2 : vector<1xf32> to vector<1x1x1x1xf32>
    %4 = vector.extract %3[0, 0, 0, 0] : f32 from vector<1x1x1x1xf32>
    %cst_2 = arith.constant 1.024000e+03 : f32
    %5 = arith.divf %4, %cst_2 : f32
    %6 = vector.broadcast %5 : f32 to vector<1x8x128xf32>
    %7 = arith.subf %0, %6 : vector<1x8x128xf32>
    %8 = arith.mulf %7, %7 : vector<1x8x128xf32>
    %9 = vector.shape_cast %8 : vector<1x8x128xf32> to vector<1x1x8x128xf32>
    %cst_3 = arith.constant dense<0.000000e+00> : vector<1xf32>
    %10 = vector.multi_reduction <add>, %9, %cst_3 [1, 2, 3] : vector<1x1x8x128xf32> to vector<1xf32>
    %11 = vector.shape_cast %10 : vector<1xf32> to vector<1x1x1x1xf32>
    %12 = vector.extract %11[0, 0, 0, 0] : f32 from vector<1x1x1x1xf32>
    %cst_4 = arith.constant 1.024000e+03 : f32
    %13 = arith.divf %12, %cst_4 : f32
    %cst_5 = arith.constant 9.99999974E-6 : f32
    %14 = arith.addf %13, %cst_5 : f32
    %15 = math.rsqrt %14 : f32
    %c0_6 = arith.constant 0 : index
    %c0_7 = arith.constant 0 : index
    %c0_8 = arith.constant 0 : index
    %16 = vector.load %arg2[%c0_6, %c0_7, %c0_8] : memref<1x8x1xf32, #tpu.memory_space<vmem>>, vector<1x8x1xf32>
    %17 = vector.broadcast %15 : f32 to vector<1x8x1xf32>
    %18 = arith.mulf %17, %16 : vector<1x8x1xf32>
    %19 = vector.broadcast %18 : vector<1x8x1xf32> to vector<1x8x128xf32>
    %20 = arith.mulf %7, %19 : vector<1x8x128xf32>
    %c0_9 = arith.constant 0 : index
    %c0_10 = arith.constant 0 : index
    %c0_11 = arith.constant 0 : index
    %21 = vector.load %arg3[%c0_9, %c0_10, %c0_11] : memref<1x8x1xf32, #tpu.memory_space<vmem>>, vector<1x8x1xf32>
    %22 = vector.broadcast %21 : vector<1x8x1xf32> to vector<1x8x128xf32>
    %23 = arith.addf %20, %22 : vector<1x8x128xf32>
    %c0_12 = arith.constant 0 : index
    %c0_13 = arith.constant 0 : index
    %c0_14 = arith.constant 0 : index
    %24 = vector.load %arg4[%c0_12, %c0_13, %c0_14] : memref<1x8x128xf32, #tpu.memory_space<vmem>>, vector<1x8x128xf32>
    tpu.vector_store %arg4[%c0_12, %c0_13, %c0_14], %23 {strides = array<i32>} : memref<1x8x128xf32, #tpu.memory_space<vmem>>, vector<1x8x128xf32>,
    return
  }
  func.func @transform_0(%arg0: i32) -> (i32, i32, i32) {
    %c0_i32 = arith.constant 0 : i32
    %c0_i32_0 = arith.constant 0 : i32
    %c0_i32_1 = arith.constant 0 : i32
    return %arg0, %c0_i32, %c0_i32_0 : i32, i32, i32
  }
  func.func @transform_1(%arg0: i32) -> (i32, i32, i32) {
    %c0_i32 = arith.constant 0 : i32
    %c0_i32_0 = arith.constant 0 : i32
    %c0_i32_1 = arith.constant 0 : i32
    %c0_i32_2 = arith.constant 0 : i32
    return %c0_i32, %c0_i32_0, %c0_i32_1 : i32, i32, i32
  }
  func.func @transform_2(%arg0: i32) -> (i32, i32, i32) {
    %c0_i32 = arith.constant 0 : i32
    %c0_i32_0 = arith.constant 0 : i32
    %c0_i32_1 = arith.constant 0 : i32
    %c0_i32_2 = arith.constant 0 : i32
    return %c0_i32, %c0_i32_0, %c0_i32_1 : i32, i32, i32
  }
  func.func @transform_3(%arg0: i32) -> (i32, i32, i32) {
    %c0_i32 = arith.constant 0 : i32
    %c0_i32_0 = arith.constant 0 : i32
    %c0_i32_1 = arith.constant 0 : i32
    return %arg0, %c0_i32, %c0_i32_0 : i32, i32, i32
  }
}

</mosaic_0001>

<llo_original>
// kernel: tpu_custom_call.1
$region0: #{tpu_custom_call.1}
  #allocation0 [shape = 'u32[]', space=smem, size = 0x4, offset = 0x4, fixed_abs, tag = 'smem constant byte address 0x4 - core index']
  #allocation1 [shape = 'u32[72,128]{1,0:T(1,128)}', space=vmem, size = 0x9000, scoped, tag = 'internal scratch']
  %s0 = inlined_call_operand.vmem [shape: f32[2,8,128], index: 0, kind: input, shape index: {}]
  %s1 = inlined_call_operand.vmem [shape: f32[1,8,1], index: 1, kind: input, shape index: {}]
  %s2 = inlined_call_operand.vmem [shape: f32[1,8,1], index: 2, kind: input, shape index: {}]
  %s3 = inlined_call_operand.hbm [shape: f32[2,8,128], index: 3, kind: output, shape index: {}]
  %s4 = sld [smem:[#allocation0]]
  $region45: #{tpu_custom_call.1} parent=0
    _
  %s6 = ssub.s32 1, %s4
  %s7 = scalar_select 0, %s6, %s4
  $region1: #{tpu_custom_call.1} parent=0
    #allocation2 [shape = 'u8[8192]{0}', space=vmem, size = 0x2000, scoped, tag = 'output window, operand 0']
    #allocation3 [shape = 's32[2]{0}', space=sflag, size = 0x8, scoped, tag = 'scoped memory for tpu_custom_call.1']
    %8 = vsyncpa [#allocation3], 0
    %s9 = scalar_lea.sflag [#allocation3], 1
    %10 = vsyncpa %s9, 0
    loop: start=0, step=1, limit=4
    $region2: #{tpu_custom_call.1} parent=1 // loop_pre_header
      _
    $region3: #{tpu_custom_call.1} parent=1 // loop_header
      %s12 = sphi 0, %s16
      %p13 = scmp.ge.s32.totalorder %s12, 4
      %s22 = sphi 0, %s24
      %s25 = sphi 0, %s22
      %s26 = sphi 0, %s25
      %s42 = sphi 0, %s26
      %s46 = sphi 0, %s46
      %s48 = sphi 0, %s46
      %s49 = sphi 0, %s48
      %s63 = sphi 0, %s49
      %s67 = sphi 0, %s67
      %s69 = sphi 0, %s67
      %s70 = sphi 0, %s69
      %s84 = sphi 0, %s70
      %s90 = sphi 0, %s92
      %s93 = sphi 0, %s90
      %s94 = sphi 0, %s93
      %s110 = sphi 0, %s94
    $region4: #{tpu_custom_call.1} parent=1 // loop_header_branch
      %15 = sbr.rel (%p13) target = $region8
    $region5: #{tpu_custom_call.1} parent=1 // loop_body
      %s17 = ssub.s32 %s12, 1
      %s18 = ssub.s32 %s12, 2
      %s19 = sadd.s32 %s12, 1
      %s20 = ssub.s32 %s12, %s19
      %p21 = scmp.eq.s32.totalorder %s20, 0
      %s23 = sadd.s32 %s22, 1
      %s24 = scalar_select %p21, %s22, %s23
      %p27 = pneg %p21
      %p28 = scmp.eq.s32.totalorder %s12, 1
      %p29 = por %p27, %p28
      %p30 = scmp.ne.s32.totalorder %s22, %s25
      %p31 = scmp.eq.s32.totalorder %s12, 0
      %p32 = por %p30, %p31
      %p33 = scmp.ne.s32.totalorder %s22, %s25
      %p34 = scmp.eq.s32.totalorder %s17, 1
      %p35 = por %p33, %p34
      %p36 = scmp.ne.s32.totalorder %s25, %s26
      %p37 = scmp.eq.s32.totalorder %s17, 0
      %p38 = por %p36, %p37
      %p39 = scmp.ne.s32.totalorder %s25, %s26
      %p40 = scmp.eq.s32.totalorder %s18, 1
      %p41 = por %p39, %p40
      %p43 = scmp.ne.s32.totalorder %s26, %s42
      %p44 = scmp.eq.s32.totalorder %s18, 0
      %p45 = por %p43, %p44
      %s47 = sadd.s32 %s46, 1
      %p50 = scmp.eq.s32.totalorder %s12, 1
      %p51 = scmp.ne.s32.totalorder %s46, %s48
      %p52 = scmp.eq.s32.totalorder %s12, 0
      %p53 = por %p51, %p52
      %p54 = scmp.ne.s32.totalorder %s46, %s48
      %p55 = scmp.eq.s32.totalorder %s17, 1
      %p56 = por %p54, %p55
      %p57 = scmp.ne.s32.totalorder %s48, %s49
      %p58 = scmp.eq.s32.totalorder %s17, 0
      %p59 = por %p57, %p58
      %p60 = scmp.ne.s32.totalorder %s48, %s49
      %p61 = scmp.eq.s32.totalorder %s18, 1
      %p62 = por %p60, %p61
      %p64 = scmp.ne.s32.totalorder %s49, %s63
      %p65 = scmp.eq.s32.totalorder %s18, 0
      %p66 = por %p64, %p65
      %s68 = sadd.s32 %s67, 1
      %p71 = scmp.eq.s32.totalorder %s12, 1
      %p72 = scmp.ne.s32.totalorder %s67, %s69
      %p73 = scmp.eq.s32.totalorder %s12, 0
      %p74 = por %p72, %p73
      %p75 = scmp.ne.s32.totalorder %s67, %s69
      %p76 = scmp.eq.s32.totalorder %s17, 1
      %p77 = por %p75, %p76
      %p78 = scmp.ne.s32.totalorder %s69, %s70
      %p79 = scmp.eq.s32.totalorder %s17, 0
      %p80 = por %p78, %p79
      %p81 = scmp.ne.s32.totalorder %s69, %s70
      %p82 = scmp.eq.s32.totalorder %s18, 1
      %p83 = por %p81, %p82
      %p85 = scmp.ne.s32.totalorder %s70, %s84
      %p86 = scmp.eq.s32.totalorder %s18, 0
      %p87 = por %p85, %p86
      %s88 = ssub.s32 %s12, %s19
      %p89 = scmp.eq.s32.totalorder %s88, 0
      %s91 = sadd.s32 %s90, 1
      %s92 = scalar_select %p89, %s90, %s91
      %p95 = pneg %p89
      %p96 = scmp.eq.s32.totalorder %s12, 1
      %p97 = por %p95, %p96
      %p98 = scmp.ne.s32.totalorder %s90, %s93
      %p99 = scmp.eq.s32.totalorder %s12, 0
      %p100 = por %p98, %p99
      %p101 = scmp.ne.s32.totalorder %s90, %s93
      %p102 = scmp.eq.s32.totalorder %s17, 1
      %p103 = por %p101, %p102
      %p104 = scmp.ne.s32.totalorder %s93, %s94
      %p105 = scmp.eq.s32.totalorder %s17, 0
      %p106 = por %p104, %p105
      %p107 = scmp.ne.s32.totalorder %s93, %s94
      %p108 = scmp.eq.s32.totalorder %s18, 1
      %p109 = por %p107, %p108
      %p111 = scmp.ne.s32.totalorder %s94, %s110
      %p112 = scmp.eq.s32.totalorder %s18, 0
      %p113 = por %p111, %p112
      %p114 = scmp.le.s32.totalorder 1, %s12
      %p115 = scmp.lt.s32.totalorder %s12, 3
      %p116 = pnand %p114, %p115
      %p117 = pneg %p116
      // Predicated region
      $region9: #{tpu_custom_call.1} parent=5 // pred_check
        _
      $region10: #{tpu_custom_call.1} parent=5 // pred_check_branch
        %119 = sbr.rel (%p116) target = $region12
      $region11: #{tpu_custom_call.1} parent=5 // pred_region
        %s120 = ssub.s32 %s12, 1
        // Predicated region
        $region13: #{tpu_custom_call.1} parent=11 // pred_check
          %p121 = pneg %p59
        $region14: #{tpu_custom_call.1} parent=11 // pred_check_branch
          %123 = sbr.rel (%p121) target = $region16
        $region15: #{tpu_custom_call.1} parent=11 // pred_region
          _
        $region16: #{tpu_custom_call.1} parent=11 // pred_fallthru
          _
        // Predicated region
        $region17: #{tpu_custom_call.1} parent=11 // pred_check
          %p124 = pneg %p80
        $region18: #{tpu_custom_call.1} parent=11 // pred_check_branch
          %126 = sbr.rel (%p124) target = $region20
        $region19: #{tpu_custom_call.1} parent=11 // pred_region
          _
        $region20: #{tpu_custom_call.1} parent=11 // pred_fallthru
          _
      $region12: #{tpu_custom_call.1} parent=5 // pred_fallthru
        _
      %p127 = scmp.lt.s32.totalorder %s12, 2
      // Predicated region
      $region21: #{tpu_custom_call.1} parent=5 // pred_check
        %p128 = pneg %p127
      $region22: #{tpu_custom_call.1} parent=5 // pred_check_branch
        %130 = sbr.rel (%p128) target = $region24
      $region23: #{tpu_custom_call.1} parent=5 // pred_region
        // Predicated region
        $region25: #{tpu_custom_call.1} parent=23 // pred_check
          %p131 = pneg %p32
        $region26: #{tpu_custom_call.1} parent=23 // pred_check_branch
          %133 = sbr.rel (%p131) target = $region28
        $region27: #{tpu_custom_call.1} parent=23 // pred_region
          %p134 = scmp.lt.s32.totalorder %s12, 1
          %s135 = scalar_select %p134, %s12, 1
          %s136 = smul.addr %s135, 8
          %s137 = scalar_lea.vmem %s0, %s136
        $region28: #{tpu_custom_call.1} parent=23 // pred_fallthru
          _
      $region24: #{tpu_custom_call.1} parent=5 // pred_fallthru
        _
      %p138 = scmp.le.s32.totalorder 1, %s12
      %p139 = scmp.lt.s32.totalorder %s12, 3
      %p140 = pnand %p138, %p139
      %p141 = pneg %p140
      // Predicated region
      $region29: #{tpu_custom_call.1} parent=5 // pred_check
        _
      $region30: #{tpu_custom_call.1} parent=5 // pred_check_branch
        %143 = sbr.rel (%p140) target = $region32
      $region31: #{tpu_custom_call.1} parent=5 // pred_region
        %s144 = ssub.s32 %s12, 1
        %p145 = scmp.lt.s32.totalorder %s17, 1
        %s146 = scalar_select %p145, %s17, 1
        %s147 = smul.addr %s146, 8
        %s148 = scalar_lea.vmem %s0, %s147
        %p149 = pneg %p38
        %p150 = pneg %p35
        %p151 = pneg %p59
        %p152 = pneg %p56
        %p153 = pneg %p80
        %p154 = pneg %p77
        %p155 = pneg %p106
        %p156 = pneg %p103
        %s157 = sand.u32 %s93, 1
        %s158 = scalar_lea.sflag [#allocation3], %s157
        %s159 = sand.u32 %s93, 1
        %s160 = smul.addr %s159, 8
        %s161 = scalar_lea.vmem [#allocation2], %s160
        %p162 = scmp.lt.s32.totalorder %s17, 1
        %s163 = scalar_select %p162, %s17, 1
        %s164 = smul.addr %s163, 8
        %s165 = scalar_lea.vmem %s0, %s164
        %v166 = vld [vmem:[%s165] sm:$0xff]
        %167 = vadd.xlane.f32.xlu0 %v166
        %v168 = vpop.xlane.xlu0 %167
        %v169 = vrot.slane %v168, 4
        %v170 = vadd.f32 %v168, %v169
        %v171 = vrot.slane %v170, 2
        %v172 = vadd.f32 %v170, %v171
        %v173 = vrot.slane %v172, 1
        %v174 = vadd.f32 %v172, %v173
        %s175 = vtos %v174
        %v176 = vrcp.pop 1024.0
        %v177 = vmul.f32 1024.0, %v176
        %v178 = vsub.f32 1.0, %v177
        %v179 = vmul.f32 %v176, %v178
        %v180 = vadd.f32 %v176, %v179
        %vm181 = vweird.f32 %v176
        %v182 = vsel %vm181, %v176, %v180
        %s183 = vtos %v182
        %s184 = smul.f32 %s175, %s183
        %v185 = vstv %s184
        %v186 = vsub.f32 %v166, %v185
        %v187 = vmul.f32 %v186, %v186
        %188 = vadd.xlane.f32.xlu0 %v187
        %v189 = vpop.xlane.xlu0 %188
        %v190 = vrot.slane %v189, 4
        %v191 = vadd.f32 %v189, %v190
        %v192 = vrot.slane %v191, 2
        %v193 = vadd.f32 %v191, %v192
        %v194 = vrot.slane %v193, 1
        %v195 = vadd.f32 %v193, %v194
        %s196 = vtos %v195
        %v197 = vrcp.pop 1024.0
        %v198 = vmul.f32 1024.0, %v197
        %v199 = vsub.f32 1.0, %v198
        %v200 = vmul.f32 %v197, %v199
        %v201 = vadd.f32 %v197, %v200
        %vm202 = vweird.f32 %v197
        %v203 = vsel %vm202, %v197, %v201
        %s204 = vtos %v203
        %s205 = smul.f32 %s196, %s204
        %s206 = sadd.f32 %s205, 1e-05
        %v207 = vstv %s206
        %v208 = vrsqrt.pop %v207
        %v209 = vmul.f32 %v208, %v207
        %v210 = vmul.f32 %v209, %v208
        %v211 = vmul.f32 0.5, %v210
        %v212 = vsub.f32 1.5, %v211
        %v213 = vmul.f32 %v208, %v212
        %vm214 = vweird.f32 %v207
        %vm215 = vweird.f32 %v208
        %vm216 = vmor %vm214, %vm215
        %v217 = vsel %vm216, %v208, %v213
        %s218 = vtos %v217
        %v219 = vld [vmem:[%s1] sm:$0xff]
        %v220 = vstv %s218
        %v221 = vmul.f32 %v220, %v219
        %223 = vset.pattern.permute.xlu0 0
        %224 = vperm.xlu0 %223, %v221
        %v225 = vpop.permute.xlu0 %224
        %v227 = vmul.f32 %v186, %v225
        %v228 = vld [vmem:[%s2] sm:$0xff]
        %230 = vset.pattern.permute.xlu0 0
        %231 = vperm.xlu0 %230, %v228
        %v232 = vpop.permute.xlu0 %231
        %v234 = vadd.f32 %v227, %v232
        %235 = vst [vmem:[%s161] sm:$0xff] %v234
        %s236 = sand.u32 %s93, 1
        %s237 = scalar_lea.sflag [#allocation3], %s236
        %s238 = sand.u32 %s93, 1
        %s239 = smul.addr %s238, 8
        %s240 = scalar_lea.vmem [#allocation2], %s239
        // Predicated region
        $region33: #{tpu_custom_call.1} parent=31 // pred_check
          %p241 = pneg %p103
        $region34: #{tpu_custom_call.1} parent=31 // pred_check_branch
          %243 = sbr.rel (%p241) target = $region36
        $region35: #{tpu_custom_call.1} parent=31 // pred_region
          %245 = vsyncadd %s237, 0
          %s246 = smul.addr %s17, 8
          %s247 = scalar_lea.hbm %s3, %s246
          %s249 = sshll.u32 %s240, 4
          %s250 = int_to_ptr.vmem [resolvable:$true] %s249
          %s251 = sshll.u32 %s247, 4
          %s252 = int_to_ptr.hbm [resolvable:$true] %s251
          %254 = dma.vmem_to_hbm [thread:$0]  %s250, 128, %s252, %s237
        $region36: #{tpu_custom_call.1} parent=31 // pred_fallthru
          _
      $region32: #{tpu_custom_call.1} parent=5 // pred_fallthru
        _
      %p255 = scmp.le.s32.totalorder 2, %s12
      // Predicated region
      $region37: #{tpu_custom_call.1} parent=5 // pred_check
        %p256 = pneg %p255
      $region38: #{tpu_custom_call.1} parent=5 // pred_check_branch
        %258 = sbr.rel (%p256) target = $region40
      $region39: #{tpu_custom_call.1} parent=5 // pred_region
        %s259 = ssub.s32 %s12, 2
        // Predicated region
        $region41: #{tpu_custom_call.1} parent=39 // pred_check
          %p260 = pneg %p109
        $region42: #{tpu_custom_call.1} parent=39 // pred_check_branch
          %262 = sbr.rel (%p260) target = $region44
        $region43: #{tpu_custom_call.1} parent=39 // pred_region
          %s263 = sand.u32 %s94, 1
          %s264 = scalar_lea.sflag [#allocation3], %s263
          %s265 = sand.u32 %s94, 1
          %s266 = smul.addr %s265, 8
          %s267 = scalar_lea.vmem [#allocation2], %s266
          %269 = dma.done %s264, 128
        $region44: #{tpu_custom_call.1} parent=39 // pred_fallthru
          _
      $region40: #{tpu_custom_call.1} parent=5 // pred_fallthru
        _
    $region6: #{tpu_custom_call.1} parent=1 // loop_footer
      %s16 = sadd.s32 1, %s12
    $region7: #{tpu_custom_call.1} parent=1 // loop_footer_branch
      %11 = sbr.rel target = $region3
    $region8: #{tpu_custom_call.1} parent=1 // loop_exit
      _
    %270 = vsyncpa [#allocation3], 1
    %s271 = scalar_lea.sflag [#allocation3], 1
    %272 = vsyncpa %s271, 1

</llo_original>
